<compile_context>
chip_gen: v5e
topology: v5e:2x2
jax: 0.10.0
libtpu: 0.0.40
codegen_flags: <defaults>
</compile_context>

<pallas_src>
import functools

import numpy as np
import jax
import jax.numpy as jnp
from jax.experimental import pallas as pl
from jax.experimental.pallas import tpu as pltpu

BN_EPS = 1e-5


def _round_up(n, m):
    return ((n + m - 1) // m) * m


# ---------------------------------------------------------------------------
# Fused kernel: conv1+bn1+relu -> conv2+bn2 -> (+ shortcut[+bn]) -> relu
# Activations are (channels, pixels) with pixels = N*Ho*Wo in lanes.
# ---------------------------------------------------------------------------
def _basic_block_kernel(*refs, Wo, M, Cinp, inv_m, has_proj, build_patches):
    if has_proj:
        src_ref, mask_ref, w1_ref, w2_ref, ws_ref, bn_ref, o_ref = refs
    else:
        src_ref, mask_ref, w1_ref, w2_ref, bn_ref, o_ref = refs
    f32 = jnp.float32

    def make_patches(a):
        # a: (Cx, M) activation on the Ho x Wo output grid.  Returns the nine
        # 3x3 taps stacked along the contraction (sublane) axis: (9*Cx, M).
        # Tap selection = lane roll (XLU) + 0/1 edge-mask multiply (VPU); no MXU.
        taps = []
        for kh in range(3):
            for kw in range(3):
                d = (kh - 1) * Wo + (kw - 1)            # flat pixel shift
                if d == 0:
                    taps.append(a)
                else:
                    t = pltpu.roll(a, shift=(-d) % M, axis=1)
                    taps.append(t * mask_ref[kh * 3 + kw:kh * 3 + kw + 1, :])
        return jnp.concatenate(taps, axis=0)

    bnv = bn_ref[...]                                    # (Cp, 8): g1 b1 g2 b2 gs bs 0 0

    def bn_train(y, gi, bi):
        # Train-mode BatchNorm folded into ONE multiply-add; per-channel stats
        # are lane reductions (XLU) with the variance clamped at 0.
        s1 = jnp.sum(y, axis=1, keepdims=True) * inv_m             # E[y]
        s2 = jnp.sum(y * y, axis=1, keepdims=True) * inv_m         # E[y^2]
        var = jnp.maximum(s2 - s1 * s1, 0.0)
        scale = bnv[:, gi:gi + 1] * jax.lax.rsqrt(var + BN_EPS)
        return y * scale + (bnv[:, bi:bi + 1] - s1 * scale)

    src = src_ref[...]

    # conv1 (3x3, stride, pad=1): ONE MXU matmul, all 9 taps fused along K.
    p1 = make_patches(src) if build_patches else src               # (9*Cinp, M)
    y1 = jnp.dot(w1_ref[...], p1, preferred_element_type=f32)      # (Cp, M)
    out1 = jnp.maximum(bn_train(y1, 0, 1), 0.0)                    # stays in VMEM

    # conv2 (3x3, stride=1, pad=1): ONE MXU matmul.
    p2 = make_patches(out1)                                        # (9*Cp, M)
    y2 = jnp.dot(w2_ref[...], p2, preferred_element_type=f32)
    y2 = bn_train(y2, 2, 3)

    # shortcut: strided 1x1 conv + bn (projection), or identity.
    if has_proj:
        # Reuse conv1's centre tap (== the strided input pixels); no re-gather.
        ctr = src if build_patches else src_ref[4 * Cinp:5 * Cinp, :]
        sc = bn_train(jnp.dot(ws_ref[...], ctr, preferred_element_type=f32), 4, 5)
    else:
        sc = src

    o_ref[...] = jnp.maximum(y2 + sc, 0.0).astype(o_ref.dtype)


# ---------------------------------------------------------------------------
# Static 0/1 edge masks for the 3x3 taps (numpy -> baked as constants)
# ---------------------------------------------------------------------------
def _tap_masks(N, Ho, Wo):
    ii, jj = np.meshgrid(np.arange(Ho), np.arange(Wo), indexing="ij")
    rows = []
    for kh in range(3):
        for kw in range(3):
            dh, dw = kh - 1, kw - 1
            v = ((ii + dh >= 0) & (ii + dh < Ho) &
                 (jj + dw >= 0) & (jj + dw < Wo)).astype(np.float32)
            rows.append(np.tile(v.reshape(-1), N))
    return np.stack(rows)                                # (9, N*Ho*Wo)


# ---------------------------------------------------------------------------
# BasicBlock forward (single fused pallas_call)
# ---------------------------------------------------------------------------
def basic_block_forward(x, params, stride):
    """x: (N, H, W, Cin) NHWC.  Returns (N, Ho, Wo, planes)."""
    f32 = jnp.float32
    N, H, W, Cin = x.shape
    C = params["w1"].shape[-1]
    Ho = (H + 2 - 3) // stride + 1
    Wo = (W + 2 - 3) // stride + 1
    M = N * Ho * Wo
    has_proj = (stride != 1) or (Cin != C)
    build_patches = (stride == 1)               # stride-1 patches built in-kernel
    Cinp, Cp = _round_up(Cin, 8), _round_up(C, 8)   # sublane-aligned channel counts

    def weight_mat(w):                          # (kh,kw,ci,co) -> (Cp, kh*kw*cip)
        kk = w.shape[0] * w.shape[1]
        ci, co = w.shape[2], w.shape[3]
        cip = _round_up(ci, 8)
        wp = jnp.zeros((kk, cip, Cp), f32).at[:, :ci, :co].set(
            w.astype(f32).reshape(kk, ci, co))
        return wp.reshape(kk * cip, Cp).T

    def chan_pixel(v):                          # (N,Ho,Wo,ci) -> (cip, M), zero-padded
        ci = v.shape[-1]
        return jnp.zeros((_round_up(ci, 8), M), f32).at[:ci, :].set(
            v.astype(f32).reshape(M, ci).T)

    if build_patches:
        src = chan_pixel(x)                                         # (Cinp, M)
    else:
        # Strided conv1 patch gather (pure data movement) done by XLA outside the
        # kernel: nine strided views of the zero-padded input, channel-padded.
        xpad = jnp.pad(x.astype(f32), ((0, 0), (1, 1), (1, 1), (0, 0)))
        src = jnp.concatenate(
            [chan_pixel(xpad[:, kh:kh + (Ho - 1) * stride + 1:stride,
                                kw:kw + (Wo - 1) * stride + 1:stride, :])
             for kh in range(3) for kw in range(3)], axis=0)        # (9*Cinp, M)

    masks = jnp.asarray(_tap_masks(N, Ho, Wo))                      # (9, M)
    w1m, w2m = weight_mat(params["w1"]), weight_mat(params["w2"])

    def bn_pack(*vs):
        b = jnp.zeros((Cp, 8), f32)
        for k, v in enumerate(vs):
            b = b.at[:C, k].set(v.astype(f32))
        return b

    if has_proj:
        inputs = (src, masks, w1m, w2m, weight_mat(params["ws"]),
                  bn_pack(params["g1"], params["b1"], params["g2"], params["b2"],
                          params["gs"], params["bs"]))
    else:
        inputs = (src, masks, w1m, w2m,
                  bn_pack(params["g1"], params["b1"], params["g2"], params["b2"]))

    kernel = functools.partial(_basic_block_kernel, Wo=Wo, M=M, Cinp=Cinp,
                               inv_m=1.0 / M, has_proj=has_proj,
                               build_patches=build_patches)
    vspec = pl.BlockSpec(memory_space=pltpu.MemorySpace.VMEM)
    out2d = pl.pallas_call(
        kernel,
        out_shape=jax.ShapeDtypeStruct((Cp, M), f32),
        in_specs=[vspec] * len(inputs),
        out_specs=vspec,
    )(*inputs)
    return out2d[:C, :].T.reshape(N, Ho, Wo, C)


# ---------------------------------------------------------------------------
# Pure-JAX reference (correctness check)
# ---------------------------------------------------------------------------
def _bn_train_ref(y, gamma, beta):
    mean = jnp.mean(y, axis=(0, 1, 2), keepdims=True)
    var = jnp.mean((y - mean) ** 2, axis=(0, 1, 2), keepdims=True)
    return (y - mean) * jax.lax.rsqrt(var + BN_EPS) * gamma + beta


def _conv_ref(x, w, stride, padding):
    return jax.lax.conv_general_dilated(
        x, w, window_strides=(stride, stride),
        padding=[(padding, padding), (padding, padding)],
        dimension_numbers=("NHWC", "HWIO", "NHWC"))


def basic_block_ref(x, params, stride):
    planes = params["w1"].shape[-1]
    out = jax.nn.relu(_bn_train_ref(_conv_ref(x, params["w1"], stride, 1),
                                    params["g1"], params["b1"]))
    out = _bn_train_ref(_conv_ref(out, params["w2"], 1, 1), params["g2"], params["b2"])
    if stride != 1 or x.shape[-1] != planes:
        sc = _bn_train_ref(_conv_ref(x, params["ws"], stride, 0),
                           params["gs"], params["bs"])
    else:
        sc = x
    return jax.nn.relu(out + sc)


# ---------------------------------------------------------------------------
if __name__ == "__main__":
    N, H, W = 2, 16, 16
    key = jax.random.PRNGKey(0)
    ks = jax.random.split(key, 12)
    fwd = jax.jit(basic_block_forward, static_argnames=("stride",))
    ok = True

    # Config 1: projection shortcut (stride=2, channels 4 -> 8).
    in_planes, planes, stride = 4, 8, 2
    x = jax.random.normal(ks[0], (N, H, W, in_planes), jnp.float32)
    params = dict(
        w1=0.1 * jax.random.normal(ks[1], (3, 3, in_planes, planes), jnp.float32),
        g1=1.0 + 0.1 * jax.random.normal(ks[2], (planes,), jnp.float32),
        b1=0.1 * jax.random.normal(ks[3], (planes,), jnp.float32),
        w2=0.1 * jax.random.normal(ks[4], (3, 3, planes, planes), jnp.float32),
        g2=jnp.ones((planes,), jnp.float32),
        b2=jnp.zeros((planes,), jnp.float32),
        ws=0.1 * jax.random.normal(ks[5], (1, 1, in_planes, planes), jnp.float32),
        gs=1.0 + 0.1 * jax.random.normal(ks[6], (planes,), jnp.float32),
        bs=0.1 * jax.random.normal(ks[7], (planes,), jnp.float32),
    )
    out = jax.block_until_ready(fwd(x, params, stride=stride))
    ref = jax.block_until_ready(basic_block_ref(x, params, stride))
    err1 = float(jnp.max(jnp.abs(out - ref)))
    ok = ok and (out.shape == (N, H // stride, W // stride, planes)) and (err1 < 1e-4)

    # Config 2: identity shortcut (stride=1, channels 4 -> 4).
    p2 = 4
    x2 = jax.random.normal(ks[8], (N, H, W, p2), jnp.float32)
    params2 = dict(
        w1=0.1 * jax.random.normal(ks[9], (3, 3, p2, p2), jnp.float32),
        g1=jnp.ones((p2,), jnp.float32),
        b1=jnp.zeros((p2,), jnp.float32),
        w2=0.1 * jax.random.normal(ks[10], (3, 3, p2, p2), jnp.float32),
        g2=1.0 + 0.1 * jax.random.normal(ks[11], (p2,), jnp.float32),
        b2=jnp.zeros((p2,), jnp.float32),
    )
    out2 = jax.block_until_ready(fwd(x2, params2, stride=1))
    ref2 = jax.block_until_ready(basic_block_ref(x2, params2, 1))
    err2 = float(jnp.max(jnp.abs(out2 - ref2)))
    ok = ok and (out2.shape == (N, H, W, p2)) and (err2 < 1e-4)

    if ok:
        print("KERNEL_OK")
    else:
        print(f"MISMATCH err_proj={err1} err_identity={err2}")
</pallas_src>

<mosaic_0001>
module attributes {stable_mosaic.version = 11 : i64} {
  func.func @_basic_block_kernel(%arg0: memref<72x128xf32, #tpu.memory_space<vmem>>, %arg1: memref<9x128xf32, #tpu.memory_space<vmem>>, %arg2: memref<8x72xf32, #tpu.memory_space<vmem>>, %arg3: memref<8x72xf32, #tpu.memory_space<vmem>>, %arg4: memref<8x8xf32, #tpu.memory_space<vmem>>, %arg5: memref<8x8xf32, #tpu.memory_space<vmem>>, %arg6: memref<8x128xf32, #tpu.memory_space<vmem>>) attributes {dimension_semantics = [], scalar_prefetch = 0 : i64, scratch_operands = 0 : i64, tpu.core_type = #tpu.core_type<tc>} {
    %c0 = arith.constant 0 : index
    %c0_0 = arith.constant 0 : index
    %0 = vector.load %arg5[%c0, %c0_0] : memref<8x8xf32, #tpu.memory_space<vmem>>, vector<8x8xf32>
    %c0_1 = arith.constant 0 : index
    %c0_2 = arith.constant 0 : index
    %1 = vector.load %arg0[%c0_1, %c0_2] : memref<72x128xf32, #tpu.memory_space<vmem>>, vector<72x128xf32>
    %c0_3 = arith.constant 0 : index
    %c0_4 = arith.constant 0 : index
    %2 = vector.load %arg2[%c0_3, %c0_4] : memref<8x72xf32, #tpu.memory_space<vmem>>, vector<8x72xf32>
    %cst = arith.constant dense<0.000000e+00> : vector<8x128xf32>
    %3 = tpu.matmul %2, %1, %cst {dimension_numbers = #tpu.dot_dimension_numbers<[1], [0], [0], [1], [0, 0, 1, 1], [], []>} : vector<8x72xf32>, vector<72x128xf32>, vector<8x128xf32> -> vector<8x128xf32>
    %cst_5 = arith.constant dense<0.000000e+00> : vector<8xf32>
    %4 = vector.multi_reduction <add>, %3, %cst_5 [1] : vector<8x128xf32> to vector<8xf32>
    %5 = vector.shape_cast %4 : vector<8xf32> to vector<8x1xf32>
    %cst_6 = arith.constant 7.812500e-03 : f32
    %6 = vector.broadcast %cst_6 : f32 to vector<8x1xf32>
    %7 = arith.mulf %5, %6 : vector<8x1xf32>
    %8 = arith.mulf %3, %3 : vector<8x128xf32>
    %cst_7 = arith.constant dense<0.000000e+00> : vector<8xf32>
    %9 = vector.multi_reduction <add>, %8, %cst_7 [1] : vector<8x128xf32> to vector<8xf32>
    %10 = vector.shape_cast %9 : vector<8xf32> to vector<8x1xf32>
    %cst_8 = arith.constant 7.812500e-03 : f32
    %11 = vector.broadcast %cst_8 : f32 to vector<8x1xf32>
    %12 = arith.mulf %10, %11 : vector<8x1xf32>
    %13 = arith.mulf %7, %7 : vector<8x1xf32>
    %14 = arith.subf %12, %13 : vector<8x1xf32>
    %cst_9 = arith.constant 0.000000e+00 : f32
    %15 = vector.broadcast %cst_9 : f32 to vector<8x1xf32>
    %16 = arith.maximumf %14, %15 : vector<8x1xf32>
    %17 = vector.extract_strided_slice %0 {offsets = [0, 0], sizes = [8, 1], strides = [1, 1]} : vector<8x8xf32> to vector<8x1xf32>
    %cst_10 = arith.constant 9.99999974E-6 : f32
    %18 = vector.broadcast %cst_10 : f32 to vector<8x1xf32>
    %19 = arith.addf %16, %18 : vector<8x1xf32>
    %20 = math.rsqrt %19 : vector<8x1xf32>
    %21 = arith.mulf %17, %20 : vector<8x1xf32>
    %22 = vector.broadcast %21 : vector<8x1xf32> to vector<8x128xf32>
    %23 = arith.mulf %3, %22 : vector<8x128xf32>
    %24 = vector.extract_strided_slice %0 {offsets = [0, 1], sizes = [8, 1], strides = [1, 1]} : vector<8x8xf32> to vector<8x1xf32>
    %25 = arith.mulf %7, %21 : vector<8x1xf32>
    %26 = arith.subf %24, %25 : vector<8x1xf32>
    %27 = vector.broadcast %26 : vector<8x1xf32> to vector<8x128xf32>
    %28 = arith.addf %23, %27 : vector<8x128xf32>
    %cst_11 = arith.constant 0.000000e+00 : f32
    %29 = vector.broadcast %cst_11 : f32 to vector<8x128xf32>
    %30 = arith.maximumf %28, %29 : vector<8x128xf32>
    %c9_i32 = arith.constant 9 : i32
    %31 = tpu.dynamic_rotate %30 by %c9_i32 dim 1 : vector<8x128xf32>, i32 -> vector<8x128xf32>
    %c0_12 = arith.constant 0 : index
    %c0_13 = arith.constant 0 : index
    %32 = vector.load %arg1[%c0_12, %c0_13] : memref<9x128xf32, #tpu.memory_space<vmem>>, vector<1x128xf32>
    %33 = vector.broadcast %32 : vector<1x128xf32> to vector<8x128xf32>
    %34 = arith.mulf %31, %33 : vector<8x128xf32>
    %c8_i32 = arith.constant 8 : i32
    %35 = tpu.dynamic_rotate %30 by %c8_i32 dim 1 : vector<8x128xf32>, i32 -> vector<8x128xf32>
    %c1 = arith.constant 1 : index
    %c0_14 = arith.constant 0 : index
    %36 = vector.load %arg1[%c1, %c0_14] : memref<9x128xf32, #tpu.memory_space<vmem>>, vector<1x128xf32>
    %37 = vector.broadcast %36 : vector<1x128xf32> to vector<8x128xf32>
    %38 = arith.mulf %35, %37 : vector<8x128xf32>
    %c7_i32 = arith.constant 7 : i32
    %39 = tpu.dynamic_rotate %30 by %c7_i32 dim 1 : vector<8x128xf32>, i32 -> vector<8x128xf32>
    %c2 = arith.constant 2 : index
    %c0_15 = arith.constant 0 : index
    %40 = vector.load %arg1[%c2, %c0_15] : memref<9x128xf32, #tpu.memory_space<vmem>>, vector<1x128xf32>
    %41 = vector.broadcast %40 : vector<1x128xf32> to vector<8x128xf32>
    %42 = arith.mulf %39, %41 : vector<8x128xf32>
    %c1_i32 = arith.constant 1 : i32
    %43 = tpu.dynamic_rotate %30 by %c1_i32 dim 1 : vector<8x128xf32>, i32 -> vector<8x128xf32>
    %c3 = arith.constant 3 : index
    %c0_16 = arith.constant 0 : index
    %44 = vector.load %arg1[%c3, %c0_16] : memref<9x128xf32, #tpu.memory_space<vmem>>, vector<1x128xf32>
    %45 = vector.broadcast %44 : vector<1x128xf32> to vector<8x128xf32>
    %46 = arith.mulf %43, %45 : vector<8x128xf32>
    %c127_i32 = arith.constant 127 : i32
    %47 = tpu.dynamic_rotate %30 by %c127_i32 dim 1 : vector<8x128xf32>, i32 -> vector<8x128xf32>
    %c5 = arith.constant 5 : index
    %c0_17 = arith.constant 0 : index
    %48 = vector.load %arg1[%c5, %c0_17] : memref<9x128xf32, #tpu.memory_space<vmem>>, vector<1x128xf32>
    %49 = vector.broadcast %48 : vector<1x128xf32> to vector<8x128xf32>
    %50 = arith.mulf %47, %49 : vector<8x128xf32>
    %c121_i32 = arith.constant 121 : i32
    %51 = tpu.dynamic_rotate %30 by %c121_i32 dim 1 : vector<8x128xf32>, i32 -> vector<8x128xf32>
    %c6 = arith.constant 6 : index
    %c0_18 = arith.constant 0 : index
    %52 = vector.load %arg1[%c6, %c0_18] : memref<9x128xf32, #tpu.memory_space<vmem>>, vector<1x128xf32>
    %53 = vector.broadcast %52 : vector<1x128xf32> to vector<8x128xf32>
    %54 = arith.mulf %51, %53 : vector<8x128xf32>
    %c120_i32 = arith.constant 120 : i32
    %55 = tpu.dynamic_rotate %30 by %c120_i32 dim 1 : vector<8x128xf32>, i32 -> vector<8x128xf32>
    %c7 = arith.constant 7 : index
    %c0_19 = arith.constant 0 : index
    %56 = vector.load %arg1[%c7, %c0_19] : memref<9x128xf32, #tpu.memory_space<vmem>>, vector<1x128xf32>
    %57 = vector.broadcast %56 : vector<1x128xf32> to vector<8x128xf32>
    %58 = arith.mulf %55, %57 : vector<8x128xf32>
    %c119_i32 = arith.constant 119 : i32
    %59 = tpu.dynamic_rotate %30 by %c119_i32 dim 1 : vector<8x128xf32>, i32 -> vector<8x128xf32>
    %c8 = arith.constant 8 : index
    %c0_20 = arith.constant 0 : index
    %60 = vector.load %arg1[%c8, %c0_20] : memref<9x128xf32, #tpu.memory_space<vmem>>, vector<1x128xf32>
    %61 = vector.broadcast %60 : vector<1x128xf32> to vector<8x128xf32>
    %62 = arith.mulf %59, %61 : vector<8x128xf32>
    %63 = tpu.concatenate %34, %38, %42, %46, %30, %50, %54, %58, %62 in 0 : vector<8x128xf32>, vector<8x128xf32>, vector<8x128xf32>, vector<8x128xf32>, vector<8x128xf32>, vector<8x128xf32>, vector<8x128xf32>, vector<8x128xf32>, vector<8x128xf32> -> vector<72x128xf32>
    %c0_21 = arith.constant 0 : index
    %c0_22 = arith.constant 0 : index
    %64 = vector.load %arg3[%c0_21, %c0_22] : memref<8x72xf32, #tpu.memory_space<vmem>>, vector<8x72xf32>
    %cst_23 = arith.constant dense<0.000000e+00> : vector<8x128xf32>
    %65 = tpu.matmul %64, %63, %cst_23 {dimension_numbers = #tpu.dot_dimension_numbers<[1], [0], [0], [1], [0, 0, 1, 1], [], []>} : vector<8x72xf32>, vector<72x128xf32>, vector<8x128xf32> -> vector<8x128xf32>
    %cst_24 = arith.constant dense<0.000000e+00> : vector<8xf32>
    %66 = vector.multi_reduction <add>, %65, %cst_24 [1] : vector<8x128xf32> to vector<8xf32>
    %67 = vector.shape_cast %66 : vector<8xf32> to vector<8x1xf32>
    %cst_25 = arith.constant 7.812500e-03 : f32
    %68 = vector.broadcast %cst_25 : f32 to vector<8x1xf32>
    %69 = arith.mulf %67, %68 : vector<8x1xf32>
    %70 = arith.mulf %65, %65 : vector<8x128xf32>
    %cst_26 = arith.constant dense<0.000000e+00> : vector<8xf32>
    %71 = vector.multi_reduction <add>, %70, %cst_26 [1] : vector<8x128xf32> to vector<8xf32>
    %72 = vector.shape_cast %71 : vector<8xf32> to vector<8x1xf32>
    %cst_27 = arith.constant 7.812500e-03 : f32
    %73 = vector.broadcast %cst_27 : f32 to vector<8x1xf32>
    %74 = arith.mulf %72, %73 : vector<8x1xf32>
    %75 = arith.mulf %69, %69 : vector<8x1xf32>
    %76 = arith.subf %74, %75 : vector<8x1xf32>
    %cst_28 = arith.constant 0.000000e+00 : f32
    %77 = vector.broadcast %cst_28 : f32 to vector<8x1xf32>
    %78 = arith.maximumf %76, %77 : vector<8x1xf32>
    %79 = vector.extract_strided_slice %0 {offsets = [0, 2], sizes = [8, 1], strides = [1, 1]} : vector<8x8xf32> to vector<8x1xf32>
    %cst_29 = arith.constant 9.99999974E-6 : f32
    %80 = vector.broadcast %cst_29 : f32 to vector<8x1xf32>
    %81 = arith.addf %78, %80 : vector<8x1xf32>
    %82 = math.rsqrt %81 : vector<8x1xf32>
    %83 = arith.mulf %79, %82 : vector<8x1xf32>
    %84 = vector.broadcast %83 : vector<8x1xf32> to vector<8x128xf32>
    %85 = arith.mulf %65, %84 : vector<8x128xf32>
    %86 = vector.extract_strided_slice %0 {offsets = [0, 3], sizes = [8, 1], strides = [1, 1]} : vector<8x8xf32> to vector<8x1xf32>
    %87 = arith.mulf %69, %83 : vector<8x1xf32>
    %88 = arith.subf %86, %87 : vector<8x1xf32>
    %89 = vector.broadcast %88 : vector<8x1xf32> to vector<8x128xf32>
    %90 = arith.addf %85, %89 : vector<8x128xf32>
    %c32 = arith.constant 32 : index
    %c0_30 = arith.constant 0 : index
    %91 = vector.load %arg0[%c32, %c0_30] : memref<72x128xf32, #tpu.memory_space<vmem>>, vector<8x128xf32>
    %c0_31 = arith.constant 0 : index
    %c0_32 = arith.constant 0 : index
    %92 = vector.load %arg4[%c0_31, %c0_32] : memref<8x8xf32, #tpu.memory_space<vmem>>, vector<8x8xf32>
    %cst_33 = arith.constant dense<0.000000e+00> : vector<8x128xf32>
    %93 = tpu.matmul %92, %91, %cst_33 {dimension_numbers = #tpu.dot_dimension_numbers<[1], [0], [0], [1], [0, 0, 1, 1], [], []>} : vector<8x8xf32>, vector<8x128xf32>, vector<8x128xf32> -> vector<8x128xf32>
    %cst_34 = arith.constant dense<0.000000e+00> : vector<8xf32>
    %94 = vector.multi_reduction <add>, %93, %cst_34 [1] : vector<8x128xf32> to vector<8xf32>
    %95 = vector.shape_cast %94 : vector<8xf32> to vector<8x1xf32>
    %cst_35 = arith.constant 7.812500e-03 : f32
    %96 = vector.broadcast %cst_35 : f32 to vector<8x1xf32>
    %97 = arith.mulf %95, %96 : vector<8x1xf32>
    %98 = arith.mulf %93, %93 : vector<8x128xf32>
    %cst_36 = arith.constant dense<0.000000e+00> : vector<8xf32>
    %99 = vector.multi_reduction <add>, %98, %cst_36 [1] : vector<8x128xf32> to vector<8xf32>
    %100 = vector.shape_cast %99 : vector<8xf32> to vector<8x1xf32>
    %cst_37 = arith.constant 7.812500e-03 : f32
    %101 = vector.broadcast %cst_37 : f32 to vector<8x1xf32>
    %102 = arith.mulf %100, %101 : vector<8x1xf32>
    %103 = arith.mulf %97, %97 : vector<8x1xf32>
    %104 = arith.subf %102, %103 : vector<8x1xf32>
    %cst_38 = arith.constant 0.000000e+00 : f32
    %105 = vector.broadcast %cst_38 : f32 to vector<8x1xf32>
    %106 = arith.maximumf %104, %105 : vector<8x1xf32>
    %107 = vector.extract_strided_slice %0 {offsets = [0, 4], sizes = [8, 1], strides = [1, 1]} : vector<8x8xf32> to vector<8x1xf32>
    %cst_39 = arith.constant 9.99999974E-6 : f32
    %108 = vector.broadcast %cst_39 : f32 to vector<8x1xf32>
    %109 = arith.addf %106, %108 : vector<8x1xf32>
    %110 = math.rsqrt %109 : vector<8x1xf32>
    %111 = arith.mulf %107, %110 : vector<8x1xf32>
    %112 = vector.broadcast %111 : vector<8x1xf32> to vector<8x128xf32>
    %113 = arith.mulf %93, %112 : vector<8x128xf32>
    %114 = vector.extract_strided_slice %0 {offsets = [0, 5], sizes = [8, 1], strides = [1, 1]} : vector<8x8xf32> to vector<8x1xf32>
    %115 = arith.mulf %97, %111 : vector<8x1xf32>
    %116 = arith.subf %114, %115 : vector<8x1xf32>
    %117 = vector.broadcast %116 : vector<8x1xf32> to vector<8x128xf32>
    %118 = arith.addf %113, %117 : vector<8x128xf32>
    %119 = arith.addf %90, %118 : vector<8x128xf32>
    %cst_40 = arith.constant 0.000000e+00 : f32
    %120 = vector.broadcast %cst_40 : f32 to vector<8x128xf32>
    %121 = arith.maximumf %119, %120 : vector<8x128xf32>
    %c0_41 = arith.constant 0 : index
    %c0_42 = arith.constant 0 : index
    %122 = vector.load %arg6[%c0_41, %c0_42] : memref<8x128xf32, #tpu.memory_space<vmem>>, vector<8x128xf32>
    tpu.vector_store %arg6[%c0_41, %c0_42], %121 {strides = array<i32>} : memref<8x128xf32, #tpu.memory_space<vmem>>, vector<8x128xf32>,
    return
  }
}

</mosaic_0001>

<llo_original>
// kernel: basic_block_forward.1
$region0: #{basic_block_forward.1}
  #allocation0 [shape = 'u32[]', space=smem, size = 0x4, offset = 0x4, fixed_abs, tag = 'smem constant byte address 0x4 - core index']
  #allocation1 [shape = 'u32[72,128]{1,0:T(1,128)}', space=vmem, size = 0x9000, scoped, tag = 'internal scratch']
  %s0 = inlined_call_operand.vmem [shape: f32[72,128], index: 0, kind: input, shape index: {}]
  %s1 = inlined_call_operand.vmem [shape: f32[9,128], index: 1, kind: input, shape index: {}]
  %s2 = inlined_call_operand.vmem [shape: f32[8,72], index: 2, kind: input, shape index: {}]
  %s3 = inlined_call_operand.vmem [shape: f32[8,72], index: 3, kind: input, shape index: {}]
  %s4 = inlined_call_operand.vmem [shape: f32[8,8], index: 4, kind: input, shape index: {}]
  %s5 = inlined_call_operand.vmem [shape: f32[8,8], index: 5, kind: input, shape index: {}]
  %s6 = inlined_call_operand.vmem [shape: f32[8,128], index: 6, kind: output, shape index: {}]
  %s7 = sld [smem:[#allocation0]]
  $region34: #{basic_block_forward.1} parent=0
    _
  %s9 = ssub.s32 1, %s7
  %s10 = scalar_select 0, %s9, %s7
  // Predicated region
  $region2: #{basic_block_forward.1} parent=0 // pred_check
    _
  $region3: #{basic_block_forward.1} parent=0 // pred_check_branch
    %12 = sbr.rel (0) target = $region5
  $region4: #{basic_block_forward.1} parent=0 // pred_region
    _
  $region5: #{basic_block_forward.1} parent=0 // pred_fallthru
    _
  // Predicated region
  $region6: #{basic_block_forward.1} parent=0 // pred_check
    _
  $region7: #{basic_block_forward.1} parent=0 // pred_check_branch
    %14 = sbr.rel (0) target = $region9
  $region8: #{basic_block_forward.1} parent=0 // pred_region
    _
  $region9: #{basic_block_forward.1} parent=0 // pred_fallthru
    _
  // Predicated region
  $region10: #{basic_block_forward.1} parent=0 // pred_check
    _
  $region11: #{basic_block_forward.1} parent=0 // pred_check_branch
    %16 = sbr.rel (0) target = $region13
  $region12: #{basic_block_forward.1} parent=0 // pred_region
    _
  $region13: #{basic_block_forward.1} parent=0 // pred_fallthru
    _
  // Predicated region
  $region14: #{basic_block_forward.1} parent=0 // pred_check
    _
  $region15: #{basic_block_forward.1} parent=0 // pred_check_branch
    %18 = sbr.rel (0) target = $region17
  $region16: #{basic_block_forward.1} parent=0 // pred_region
    _
  $region17: #{basic_block_forward.1} parent=0 // pred_fallthru
    _
  // Predicated region
  $region18: #{basic_block_forward.1} parent=0 // pred_check
    _
  $region19: #{basic_block_forward.1} parent=0 // pred_check_branch
    %20 = sbr.rel (0) target = $region21
  $region20: #{basic_block_forward.1} parent=0 // pred_region
    _
  $region21: #{basic_block_forward.1} parent=0 // pred_fallthru
    _
  // Predicated region
  $region22: #{basic_block_forward.1} parent=0 // pred_check
    _
  $region23: #{basic_block_forward.1} parent=0 // pred_check_branch
    %22 = sbr.rel (0) target = $region25
  $region24: #{basic_block_forward.1} parent=0 // pred_region
    _
  $region25: #{basic_block_forward.1} parent=0 // pred_fallthru
    _
  %v23 = vld [vmem:[%s5] sm:$0xff]
  %v24 = vld [vmem:[%s0] sm:$0xff]
  %v25 = vld [vmem:[%s0 + $0x8] sm:$0xff]
  %v26 = vld [vmem:[%s0 + $0x10] sm:$0xff]
  %v27 = vld [vmem:[%s0 + $0x18] sm:$0xff]
  %v28 = vld [vmem:[%s0 + $0x20] sm:$0xff]
  %v29 = vld [vmem:[%s0 + $0x28] sm:$0xff]
  %v30 = vld [vmem:[%s0 + $0x30] sm:$0xff]
  %v31 = vld [vmem:[%s0 + $0x38] sm:$0xff]
  %v32 = vld [vmem:[%s0 + $0x40] sm:$0xff]
  %v33 = vld [vmem:[%s2] sm:$0xff]
  %vm34 = vcmask 588800
  %v36 = vsel %vm34, %v33, 0
  %38 = vmatpush.msra.mxu0 0.0
  %39 = vmatpush.msra.mxu0 0.0
  %40 = vmatpush.msra.mxu0 0.0
  %41 = vmatpush.msra.mxu0 0.0
  %42 = vmatpush.msra.mxu0 0.0
  %43 = vmatpush.msra.mxu0 0.0
  %44 = vmatpush.msra.mxu0 0.0
  %45 = vmatpush.msra.mxu0 %v32
  %46 = vmatpush.msra.mxu0 %v31
  %47 = vmatpush.msra.mxu0 %v30
  %48 = vmatpush.msra.mxu0 %v29
  %49 = vmatpush.msra.mxu0 %v28
  %50 = vmatpush.msra.mxu0 %v27
  %51 = vmatpush.msra.mxu0 %v26
  %52 = vmatpush.msra.mxu0 %v25
  %53 = vmatpush.msra.mxu0 %v24
  %54 = vmatmul.f32.gmra.mxu0 %v36
  %v55 = vpop.f32.mrf.mxu0
  %v56 = vadd.f32 0.0, %v55
  %57 = vdwg.mxu0
  %58 = vadd.xlane.f32.xlu0 %v56
  %v59 = vpop.xlane.xlu0 %58
  %v60 = vmul.f32 %v59, 0.0078125
  %v61 = vmul.f32 %v56, %v56
  %62 = vadd.xlane.f32.xlu0 %v61
  %v63 = vpop.xlane.xlu0 %62
  %v64 = vmul.f32 %v63, 0.0078125
  %v65 = vmul.f32 %v60, %v60
  %v66 = vsub.f32 %v64, %v65
  %v67 = vmax.f32 %v66, 0.0
  %v68 = vadd.f32 %v67, 1e-05
  %v69 = vrsqrt.pop %v68
  %v70 = vmul.f32 %v69, %v68
  %v71 = vmul.f32 %v70, %v69
  %v72 = vmul.f32 0.5, %v71
  %v73 = vsub.f32 1.5, %v72
  %v74 = vmul.f32 %v69, %v73
  %vm75 = vweird.f32 %v68
  %vm76 = vweird.f32 %v69
  %vm77 = vmor %vm75, %vm76
  %v78 = vsel %vm77, %v69, %v74
  %v79 = vmul.f32 %v23, %v78
  %81 = vset.pattern.permute.xlu0 0
  %82 = vperm.xlu0 %81, %v79
  %v83 = vpop.permute.xlu0 %82
  %v85 = vmul.f32 %v56, %v83
  %v86 = vmul.f32 %v60, %v79
  %88 = vrot.lane.b32.xlu0 %v86, 1
  %v89 = vpop.permute.xlu0 %88
  %v91 = vsub.f32 %v23, %v89
  %93 = vset.pattern.permute.xlu0 1
  %94 = vperm.xlu0 %93, %v91
  %v95 = vpop.permute.xlu0 %94
  %v97 = vadd.f32 %v85, %v95
  %v98 = vmax.f32 %v97, 0.0
  %99 = vrot.lane.b32.xlu0 %v98, 9
  %v100 = vpop.permute.xlu0 %99
  %v101 = vld [vmem:[%s1] sm:$0x1]
  %v102 = vperm.slane %v101, 0
  %v103 = vmul.f32 %v100, %v102
  %104 = vrot.lane.b32.xlu0 %v98, 8
  %v105 = vpop.permute.xlu0 %104
  %v106 = vld [vmem:[%s1 + $0x1] sm:$0x1]
  %v107 = vperm.slane %v106, 0
  %v108 = vmul.f32 %v105, %v107
  %109 = vrot.lane.b32.xlu0 %v98, 7
  %v110 = vpop.permute.xlu0 %109
  %v111 = vld [vmem:[%s1 + $0x2] sm:$0x1]
  %v112 = vperm.slane %v111, 0
  %v113 = vmul.f32 %v110, %v112
  %114 = vrot.lane.b32.xlu0 %v98, 1
  %v115 = vpop.permute.xlu0 %114
  %v116 = vld [vmem:[%s1 + $0x3] sm:$0x1]
  %v117 = vperm.slane %v116, 0
  %v118 = vmul.f32 %v115, %v117
  %119 = vrot.lane.b32.xlu0 %v98, 127
  %v120 = vpop.permute.xlu0 %119
  %v121 = vld [vmem:[%s1 + $0x5] sm:$0x1]
  %v122 = vperm.slane %v121, 0
  %v123 = vmul.f32 %v120, %v122
  %124 = vrot.lane.b32.xlu0 %v98, 121
  %v125 = vpop.permute.xlu0 %124
  %v126 = vld [vmem:[%s1 + $0x6] sm:$0x1]
  %v127 = vperm.slane %v126, 0
  %v128 = vmul.f32 %v125, %v127
  %129 = vrot.lane.b32.xlu0 %v98, 120
  %v130 = vpop.permute.xlu0 %129
  %v131 = vld [vmem:[%s1 + $0x7] sm:$0x1]
  %v132 = vperm.slane %v131, 0
  %v133 = vmul.f32 %v130, %v132
  %134 = vrot.lane.b32.xlu0 %v98, 119
  %v135 = vpop.permute.xlu0 %134
  %v136 = vld [vmem:[%s1 + $0x8] sm:$0x1]
  %v137 = vperm.slane %v136, 0
  %v138 = vmul.f32 %v135, %v137
  %v139 = vld [vmem:[%s3] sm:$0xff]
  %v141 = vsel %vm34, %v139, 0
  %143 = vmatpush.msra.mxu0 0.0
  %144 = vmatpush.msra.mxu0 0.0
  %145 = vmatpush.msra.mxu0 0.0
  %146 = vmatpush.msra.mxu0 0.0
  %147 = vmatpush.msra.mxu0 0.0
  %148 = vmatpush.msra.mxu0 0.0
  %149 = vmatpush.msra.mxu0 0.0
  %150 = vmatpush.msra.mxu0 %v138
  %151 = vmatpush.msra.mxu0 %v133
  %152 = vmatpush.msra.mxu0 %v128
  %153 = vmatpush.msra.mxu0 %v123
  %154 = vmatpush.msra.mxu0 %v98
  %155 = vmatpush.msra.mxu0 %v118
  %156 = vmatpush.msra.mxu0 %v113
  %157 = vmatpush.msra.mxu0 %v108
  %158 = vmatpush.msra.mxu0 %v103
  %159 = vmatmul.f32.gmra.mxu0 %v141
  %v160 = vpop.f32.mrf.mxu0
  %v161 = vadd.f32 0.0, %v160
  %162 = vdwg.mxu0
  %163 = vadd.xlane.f32.xlu0 %v161
  %v164 = vpop.xlane.xlu0 %163
  %v165 = vmul.f32 %v164, 0.0078125
  %v166 = vmul.f32 %v161, %v161
  %167 = vadd.xlane.f32.xlu0 %v166
  %v168 = vpop.xlane.xlu0 %167
  %v169 = vmul.f32 %v168, 0.0078125
  %v170 = vmul.f32 %v165, %v165
  %v171 = vsub.f32 %v169, %v170
  %v172 = vmax.f32 %v171, 0.0
  %v173 = vadd.f32 %v172, 1e-05
  %v174 = vrsqrt.pop %v173
  %v175 = vmul.f32 %v174, %v173
  %v176 = vmul.f32 %v175, %v174
  %v177 = vmul.f32 0.5, %v176
  %v178 = vsub.f32 1.5, %v177
  %v179 = vmul.f32 %v174, %v178
  %vm180 = vweird.f32 %v173
  %vm181 = vweird.f32 %v174
  %vm182 = vmor %vm180, %vm181
  %v183 = vsel %vm182, %v174, %v179
  %v184 = vmul.f32 %v23, %v183
  %186 = vset.pattern.permute.xlu0 2
  %187 = vperm.xlu0 %186, %v184
  %v188 = vpop.permute.xlu0 %187
  %v190 = vmul.f32 %v161, %v188
  %v191 = vmul.f32 %v165, %v184
  %193 = vrot.lane.b32.xlu0 %v191, 1
  %v194 = vpop.permute.xlu0 %193
  %v196 = vsub.f32 %v23, %v194
  %198 = vset.pattern.permute.xlu0 3
  %199 = vperm.xlu0 %198, %v196
  %v200 = vpop.permute.xlu0 %199
  %v202 = vadd.f32 %v190, %v200
  %v203 = vld [vmem:[%s0 + $0x20] sm:$0xff]
  %v204 = vld [vmem:[%s4] sm:$0xff]
  %vm205 = vcmask 64512
  %v207 = vsel %vm205, %v204, 0
  %209 = vmatpush.msra.mxu0 0.0
  %210 = vmatpush.msra.mxu0 0.0
  %211 = vmatpush.msra.mxu0 0.0
  %212 = vmatpush.msra.mxu0 0.0
  %213 = vmatpush.msra.mxu0 0.0
  %214 = vmatpush.msra.mxu0 0.0
  %215 = vmatpush.msra.mxu0 0.0
  %216 = vmatpush.msra.mxu0 0.0
  %217 = vmatpush.msra.mxu0 0.0
  %218 = vmatpush.msra.mxu0 0.0
  %219 = vmatpush.msra.mxu0 0.0
  %220 = vmatpush.msra.mxu0 0.0
  %221 = vmatpush.msra.mxu0 0.0
  %222 = vmatpush.msra.mxu0 0.0
  %223 = vmatpush.msra.mxu0 0.0
  %224 = vmatpush.msra.mxu0 %v203
  %225 = vmatmul.f32.gmra.mxu0 %v207
  %v226 = vpop.f32.mrf.mxu0
  %v227 = vadd.f32 0.0, %v226
  %228 = vdwg.mxu0
  %229 = vadd.xlane.f32.xlu0 %v227
  %v230 = vpop.xlane.xlu0 %229
  %v231 = vmul.f32 %v230, 0.0078125
  %v232 = vmul.f32 %v227, %v227
  %233 = vadd.xlane.f32.xlu0 %v232
  %v234 = vpop.xlane.xlu0 %233
  %v235 = vmul.f32 %v234, 0.0078125
  %v236 = vmul.f32 %v231, %v231
  %v237 = vsub.f32 %v235, %v236
  %v238 = vmax.f32 %v237, 0.0
  %v239 = vadd.f32 %v238, 1e-05
  %v240 = vrsqrt.pop %v239
  %v241 = vmul.f32 %v240, %v239
  %v242 = vmul.f32 %v241, %v240
  %v243 = vmul.f32 0.5, %v242
  %v244 = vsub.f32 1.5, %v243
  %v245 = vmul.f32 %v240, %v244
  %vm246 = vweird.f32 %v239
  %vm247 = vweird.f32 %v240
  %vm248 = vmor %vm246, %vm247
  %v249 = vsel %vm248, %v240, %v245
  %v250 = vmul.f32 %v23, %v249
  %252 = vset.pattern.permute.xlu0 4
  %253 = vperm.xlu0 %252, %v250
  %v254 = vpop.permute.xlu0 %253
  %v256 = vmul.f32 %v227, %v254
  %v257 = vmul.f32 %v231, %v250
  %259 = vrot.lane.b32.xlu0 %v257, 1
  %v260 = vpop.permute.xlu0 %259
  %v262 = vsub.f32 %v23, %v260
  %264 = vset.pattern.permute.xlu0 5
  %265 = vperm.xlu0 %264, %v262
  %v266 = vpop.permute.xlu0 %265
  %v268 = vadd.f32 %v256, %v266
  %v269 = vadd.f32 %v202, %v268
  %v270 = vmax.f32 %v269, 0.0
  %271 = vst [vmem:[%s6] sm:$0xff] %v270
  // Predicated region
  $region26: #{basic_block_forward.1} parent=0 // pred_check
    _
  $region27: #{basic_block_forward.1} parent=0 // pred_check_branch
    %273 = sbr.rel (0) target = $region29
  $region28: #{basic_block_forward.1} parent=0 // pred_region
    _
  $region29: #{basic_block_forward.1} parent=0 // pred_fallthru
    _
  // Predicated region
  $region30: #{basic_block_forward.1} parent=0 // pred_check
    _
  $region31: #{basic_block_forward.1} parent=0 // pred_check_branch
    %275 = sbr.rel (0) target = $region33
  $region32: #{basic_block_forward.1} parent=0 // pred_region
    _
  $region33: #{basic_block_forward.1} parent=0 // pred_fallthru
    _

</llo_original>
